<compile_context>
chip_gen: v6e
topology: v6e:2x2x1
jax: 0.10.0
libtpu: 0.0.40
codegen_flags: <defaults>
</compile_context>

<pallas_src>
import functools

import jax
import jax.numpy as jnp
from jax.experimental import pallas as pl
from jax.experimental.pallas import tpu as pltpu


def _round_up(v, m):
    return (v + m - 1) // m * m


def _conv_mish_kernel(x_ref, w_ref, b_ref, o_ref, *, n_planes, n_inner,
                      lane_shift, tm):
    # x_ref: (1, n_planes, Cin_p, HF)   haloed, width-shifted input row tile
    # w_ref: (n_planes * n_inner, Cout_p, Cin_p)
    # b_ref: (Cout_p, 1)
    # o_ref: (1, Cout_p, tm)            lane-dense output tile (out^T layout)
    cout_p = o_ref.shape[1]
    acc = jnp.zeros((cout_p, tm), jnp.float32)
    for p in range(n_planes):                           # static unroll
        xplane = x_ref[0, p, :, :]                      # (Cin_p, HF)
        for t in range(n_inner):                        # static unroll
            off = t * lane_shift                        # static lane offset
            xs = xplane[:, off:off + tm]                # (Cin_p, tm)
            wk = w_ref[p * n_inner + t, :, :]           # (Cout_p, Cin_p)
            acc = acc + jnp.dot(wk, xs, preferred_element_type=jnp.float32)

    z = acc + b_ref[...]                                # bias broadcast over lanes
    # Mish: z * tanh(softplus(z)) with a single exp + approx reciprocal:
    #   tanh(log1p(e^z)) = ((1 + e^z)^2 - 1) / ((1 + e^z)^2 + 1)
    e = jnp.exp(jnp.minimum(z, 20.0))
    u = (1.0 + e) * (1.0 + e)
    mish = z * (u - 1.0) * pl.reciprocal(u + 1.0, approx=True)
    o_ref[0, :, :] = jnp.where(z > 20.0, z, mish).astype(o_ref.dtype)


@functools.partial(jax.jit, static_argnames=("kernel_size", "stride", "use_bf16"))
def conv_layer3_forward(x, weight, bias, *, kernel_size, stride, use_bf16=False):
    """x: (N, Cin, H, W) NCHW.  weight: (Cout, Cin, k, k).  bias: (Cout,)."""
    n, cin, h, w = x.shape
    cout = weight.shape[0]
    k = kernel_size
    s = stride
    pad = k // 2

    # ReflectionPad2d (cheap layout glue, done once in plain JAX).
    xp = jnp.pad(x, ((0, 0), (0, 0), (pad, pad), (pad, pad)), mode="reflect")
    hp, wp = h + 2 * pad, w + 2 * pad
    ho = (hp - k) // s + 1
    wo = (wp - k) // s + 1

    # Pad channels to multiples of 8 (f32 sublane) for aligned layouts.
    cin_p = _round_up(cin, 8)
    cout_p = _round_up(cout, 8)
    if cin_p != cin:
        xp = jnp.pad(xp, ((0, 0), (0, cin_p - cin), (0, 0), (0, 0)))

    compute_dtype = jnp.bfloat16 if use_bf16 else x.dtype
    bpe = 2 if use_bf16 else x.dtype.itemsize

    if s == 1:
        # Fused path: k width-shifted copies of the padded input (k x blowup
        # instead of k^2 for a full im2col); the k row offsets (ki) are handled
        # in-kernel with static lane-offset slices of a haloed row tile.
        n_planes, n_inner, halo, lane_shift = k, k, k - 1, wo
        # weight plane index p * n_inner + t  <->  (kj = p, ki = t)
        wt = jnp.transpose(weight, (3, 2, 0, 1)).reshape(k * k, cout, cin)
    else:
        # General-stride path: one pre-strided plane per (ki, kj) tap.
        n_planes, n_inner, halo, lane_shift = k * k, 1, 0, 0
        wt = jnp.transpose(weight, (2, 3, 0, 1)).reshape(k * k, cout, cin)

    # --- Pick the row-tile height: TM = th * Wo output pixels per grid step,
    # targeting ~1024 lane-dense pixels, bounded by a conservative VMEM budget
    # that holds on every generation (v5e scoped default raised below; v7x has
    # only 64 MiB physical VMEM).
    target_pixels = 1024
    vmem_budget = 24 * (1 << 20)

    def _vmem_need(th_):
        hf_ = (th_ + halo) * wo
        x_b = 2 * n_planes * cin_p * hf_ * bpe            # double-buffered input
        w_b = 2 * k * k * cout_p * cin_p * bpe            # constant block (tiny)
        o_b = 2 * cout_p * th_ * wo * x.dtype.itemsize    # double-buffered output
        a_b = cout_p * th_ * wo * 4                       # f32 accumulator
        return x_b + w_b + o_b + a_b

    th = min(ho, max(1, target_pixels // wo))
    while th > 1 and _vmem_need(th) > vmem_budget:
        th = max(1, th // 2)
    n_rt = -(-ho // th)              # row tiles per image
    ho_pad = n_rt * th
    tm = th * wo                     # output pixels per tile (lane axis)
    hf = (th + halo) * wo            # input lane extent per tile (incl. halo)
    nt = n * n_rt                    # grid size (>= 2 -> both v7x TCs busy)

    # --- Build the (nt, n_planes, Cin_p, hf) activation tiles (layout glue). ---
    planes = []
    for p in range(n_planes):
        if s == 1:
            kj = p
            pa = xp[:, :, :, kj:kj + wo]                      # (n, cin_p, hp, wo)
        else:
            ki, kj = divmod(p, k)
            pa = xp[:, :, ki:ki + s * (ho - 1) + 1:s,
                          kj:kj + s * (wo - 1) + 1:s]         # (n, cin_p, ho, wo)
        if ho_pad != ho:
            pa = jnp.pad(pa, ((0, 0), (0, 0), (0, ho_pad - ho), (0, 0)))
        tiles = [pa[:, :, rt * th:rt * th + th + halo, :] for rt in range(n_rt)]
        planes.append(jnp.stack(tiles, axis=1))   # (n, n_rt, cin_p, th+halo, wo)
    xt = jnp.stack(planes, axis=2)                # (n, n_rt, n_planes, cin_p, th+halo, wo)
    xt = xt.reshape(nt, n_planes, cin_p, hf).astype(compute_dtype)

    wt_p = jnp.zeros((k * k, cout_p, cin_p), wt.dtype).at[:, :cout, :cin].set(wt)
    wt_p = wt_p.astype(compute_dtype)
    b_p = jnp.zeros((cout_p, 1), jnp.float32).at[:cout, 0].set(bias.astype(jnp.float32))

    kernel = functools.partial(
        _conv_mish_kernel, n_planes=n_planes, n_inner=n_inner,
        lane_shift=lane_shift, tm=tm)

    out = pl.pallas_call(
        kernel,
        out_shape=jax.ShapeDtypeStruct((nt, cout_p, tm), x.dtype),
        grid_spec=pltpu.PrefetchScalarGridSpec(
            num_scalar_prefetch=0,
            grid=(nt,),
            in_specs=[
                pl.BlockSpec((1, n_planes, cin_p, hf), lambda m: (m, 0, 0, 0)),
                # Weight/bias blocks have constant index_maps, so they are
                # DMA'd only once; their footprint here (k^2 * 8 * 8 floats) is
                # negligible, so single-buffering them is not worth plumbing.
                pl.BlockSpec((k * k, cout_p, cin_p), lambda m: (0, 0, 0)),
                pl.BlockSpec((cout_p, 1), lambda m: (0, 0)),
            ],
            out_specs=pl.BlockSpec((1, cout_p, tm), lambda m: (m, 0, 0)),
        ),
        compiler_params=pltpu.CompilerParams(
            dimension_semantics=("parallel",),
            vmem_limit_bytes=32 * (1 << 20),
        ),
    )(xt, wt_p, b_p)

    # (nt, Cout_p, th*wo) -> (N, Cout, Ho, Wo).  Only small outer dims move;
    # there is no full channels-last <-> channels-first transpose pass.
    out = out.reshape(n, n_rt, cout_p, th, wo)
    out = jnp.moveaxis(out, 2, 1).reshape(n, cout_p, ho_pad, wo)
    return out[:, :cout, :ho, :]


def _reference(x, weight, bias, kernel_size, stride):
    pad = kernel_size // 2
    xp = jnp.pad(x, ((0, 0), (0, 0), (pad, pad), (pad, pad)), mode="reflect")
    z = jax.lax.conv_general_dilated(
        xp, weight, window_strides=(stride, stride), padding="VALID",
        dimension_numbers=("NCHW", "OIHW", "NCHW"),
    ) + bias.reshape(1, -1, 1, 1)
    return z * jnp.tanh(jax.nn.softplus(z))


if __name__ == "__main__":
    # ConvLayer3(in_channels=4, out_channels=8, kernel_size=3, stride=1)
    # applied to a (2, 4, 16, 16) NCHW input.
    key = jax.random.PRNGKey(0)
    kx, kw, kb = jax.random.split(key, 3)

    N, Cin, H, W = 2, 4, 16, 16
    Cout, K, stride = 8, 3, 1

    x = jax.random.normal(kx, (N, Cin, H, W), dtype=jnp.float32)
    fan_in = Cin * K * K
    bound = 1.0 / (fan_in ** 0.5)
    weight = jax.random.uniform(kw, (Cout, Cin, K, K), jnp.float32, -bound, bound)
    bias = jax.random.uniform(kb, (Cout,), jnp.float32, -bound, bound)

    out = conv_layer3_forward(x, weight, bias, kernel_size=K, stride=stride)
    out = jax.block_until_ready(out)

    ref = _reference(x, weight, bias, K, stride)
    assert out.shape == (N, Cout, H, W), out.shape
    # Tolerance budget: the conv accumulation is exact f32; the Mish epilogue
    # uses the EUP approximate reciprocal (>= ~12-bit), hence a few 1e-3.
    assert jnp.allclose(out, ref, atol=5e-3, rtol=5e-3), "mismatch vs reference"

    print("KERNEL_OK")
</pallas_src>

<mosaic_0001>
module attributes {stable_mosaic.version = 11 : i64} {
  func.func @_conv_mish_kernel(%arg0: i32, %arg1: memref<1x3x8x288xf32, #tpu.memory_space<vmem>>, %arg2: memref<9x8x8xf32, #tpu.memory_space<vmem>>, %arg3: memref<8x1xf32, #tpu.memory_space<vmem>>, %arg4: memref<1x8x256xf32, #tpu.memory_space<vmem>>) attributes {dimension_semantics = [#tpu.dimension_semantics<parallel>], iteration_bounds = array<i64: 2>, scalar_prefetch = 0 : i64, scratch_operands = 0 : i64, tpu.core_type = #tpu.core_type<tc>, window_params = [{transform_indices = @transform_0, window_bounds = array<i64: 1, 3, 8, 288>}, {pipeline_mode = #tpu.pipeline_mode<synchronous>, transform_indices = @transform_1, window_bounds = array<i64: 9, 8, 8>}, {pipeline_mode = #tpu.pipeline_mode<synchronous>, transform_indices = @transform_2, window_bounds = array<i64: 8, 1>}, {transform_indices = @transform_3, window_bounds = array<i64: 1, 8, 256>}]} {
    %cst = arith.constant 0.000000e+00 : f32
    %0 = vector.broadcast %cst : f32 to vector<8x256xf32>
    %c0 = arith.constant 0 : index
    %c0_0 = arith.constant 0 : index
    %c0_1 = arith.constant 0 : index
    %c0_2 = arith.constant 0 : index
    %1 = vector.load %arg1[%c0, %c0_0, %c0_1, %c0_2] : memref<1x3x8x288xf32, #tpu.memory_space<vmem>>, vector<1x1x8x288xf32>
    %2 = vector.shape_cast %1 : vector<1x1x8x288xf32> to vector<8x288xf32>
    %3 = vector.extract_strided_slice %2 {offsets = [0, 0], sizes = [8, 256], strides = [1, 1]} : vector<8x288xf32> to vector<8x256xf32>
    %c0_3 = arith.constant 0 : index
    %c0_4 = arith.constant 0 : index
    %c0_5 = arith.constant 0 : index
    %4 = vector.load %arg2[%c0_3, %c0_4, %c0_5] : memref<9x8x8xf32, #tpu.memory_space<vmem>>, vector<1x8x8xf32>
    %5 = vector.shape_cast %4 : vector<1x8x8xf32> to vector<8x8xf32>
    %cst_6 = arith.constant dense<0.000000e+00> : vector<8x256xf32>
    %6 = tpu.matmul %5, %3, %cst_6 {dimension_numbers = #tpu.dot_dimension_numbers<[1], [0], [0], [1], [0, 0, 1, 1], [], []>} : vector<8x8xf32>, vector<8x256xf32>, vector<8x256xf32> -> vector<8x256xf32>
    %7 = arith.addf %0, %6 : vector<8x256xf32>
    %8 = vector.extract_strided_slice %2 {offsets = [0, 16], sizes = [8, 256], strides = [1, 1]} : vector<8x288xf32> to vector<8x256xf32>
    %c1 = arith.constant 1 : index
    %c0_7 = arith.constant 0 : index
    %c0_8 = arith.constant 0 : index
    %9 = vector.load %arg2[%c1, %c0_7, %c0_8] : memref<9x8x8xf32, #tpu.memory_space<vmem>>, vector<1x8x8xf32>
    %10 = vector.shape_cast %9 : vector<1x8x8xf32> to vector<8x8xf32>
    %cst_9 = arith.constant dense<0.000000e+00> : vector<8x256xf32>
    %11 = tpu.matmul %10, %8, %cst_9 {dimension_numbers = #tpu.dot_dimension_numbers<[1], [0], [0], [1], [0, 0, 1, 1], [], []>} : vector<8x8xf32>, vector<8x256xf32>, vector<8x256xf32> -> vector<8x256xf32>
    %12 = arith.addf %7, %11 : vector<8x256xf32>
    %13 = vector.extract_strided_slice %2 {offsets = [0, 32], sizes = [8, 256], strides = [1, 1]} : vector<8x288xf32> to vector<8x256xf32>
    %c2 = arith.constant 2 : index
    %c0_10 = arith.constant 0 : index
    %c0_11 = arith.constant 0 : index
    %14 = vector.load %arg2[%c2, %c0_10, %c0_11] : memref<9x8x8xf32, #tpu.memory_space<vmem>>, vector<1x8x8xf32>
    %15 = vector.shape_cast %14 : vector<1x8x8xf32> to vector<8x8xf32>
    %cst_12 = arith.constant dense<0.000000e+00> : vector<8x256xf32>
    %16 = tpu.matmul %15, %13, %cst_12 {dimension_numbers = #tpu.dot_dimension_numbers<[1], [0], [0], [1], [0, 0, 1, 1], [], []>} : vector<8x8xf32>, vector<8x256xf32>, vector<8x256xf32> -> vector<8x256xf32>
    %17 = arith.addf %12, %16 : vector<8x256xf32>
    %c0_13 = arith.constant 0 : index
    %c1_14 = arith.constant 1 : index
    %c0_15 = arith.constant 0 : index
    %c0_16 = arith.constant 0 : index
    %18 = vector.load %arg1[%c0_13, %c1_14, %c0_15, %c0_16] : memref<1x3x8x288xf32, #tpu.memory_space<vmem>>, vector<1x1x8x288xf32>
    %19 = vector.shape_cast %18 : vector<1x1x8x288xf32> to vector<8x288xf32>
    %20 = vector.extract_strided_slice %19 {offsets = [0, 0], sizes = [8, 256], strides = [1, 1]} : vector<8x288xf32> to vector<8x256xf32>
    %c3 = arith.constant 3 : index
    %c0_17 = arith.constant 0 : index
    %c0_18 = arith.constant 0 : index
    %21 = vector.load %arg2[%c3, %c0_17, %c0_18] : memref<9x8x8xf32, #tpu.memory_space<vmem>>, vector<1x8x8xf32>
    %22 = vector.shape_cast %21 : vector<1x8x8xf32> to vector<8x8xf32>
    %cst_19 = arith.constant dense<0.000000e+00> : vector<8x256xf32>
    %23 = tpu.matmul %22, %20, %cst_19 {dimension_numbers = #tpu.dot_dimension_numbers<[1], [0], [0], [1], [0, 0, 1, 1], [], []>} : vector<8x8xf32>, vector<8x256xf32>, vector<8x256xf32> -> vector<8x256xf32>
    %24 = arith.addf %17, %23 : vector<8x256xf32>
    %25 = vector.extract_strided_slice %19 {offsets = [0, 16], sizes = [8, 256], strides = [1, 1]} : vector<8x288xf32> to vector<8x256xf32>
    %c4 = arith.constant 4 : index
    %c0_20 = arith.constant 0 : index
    %c0_21 = arith.constant 0 : index
    %26 = vector.load %arg2[%c4, %c0_20, %c0_21] : memref<9x8x8xf32, #tpu.memory_space<vmem>>, vector<1x8x8xf32>
    %27 = vector.shape_cast %26 : vector<1x8x8xf32> to vector<8x8xf32>
    %cst_22 = arith.constant dense<0.000000e+00> : vector<8x256xf32>
    %28 = tpu.matmul %27, %25, %cst_22 {dimension_numbers = #tpu.dot_dimension_numbers<[1], [0], [0], [1], [0, 0, 1, 1], [], []>} : vector<8x8xf32>, vector<8x256xf32>, vector<8x256xf32> -> vector<8x256xf32>
    %29 = arith.addf %24, %28 : vector<8x256xf32>
    %30 = vector.extract_strided_slice %19 {offsets = [0, 32], sizes = [8, 256], strides = [1, 1]} : vector<8x288xf32> to vector<8x256xf32>
    %c5 = arith.constant 5 : index
    %c0_23 = arith.constant 0 : index
    %c0_24 = arith.constant 0 : index
    %31 = vector.load %arg2[%c5, %c0_23, %c0_24] : memref<9x8x8xf32, #tpu.memory_space<vmem>>, vector<1x8x8xf32>
    %32 = vector.shape_cast %31 : vector<1x8x8xf32> to vector<8x8xf32>
    %cst_25 = arith.constant dense<0.000000e+00> : vector<8x256xf32>
    %33 = tpu.matmul %32, %30, %cst_25 {dimension_numbers = #tpu.dot_dimension_numbers<[1], [0], [0], [1], [0, 0, 1, 1], [], []>} : vector<8x8xf32>, vector<8x256xf32>, vector<8x256xf32> -> vector<8x256xf32>
    %34 = arith.addf %29, %33 : vector<8x256xf32>
    %c0_26 = arith.constant 0 : index
    %c2_27 = arith.constant 2 : index
    %c0_28 = arith.constant 0 : index
    %c0_29 = arith.constant 0 : index
    %35 = vector.load %arg1[%c0_26, %c2_27, %c0_28, %c0_29] : memref<1x3x8x288xf32, #tpu.memory_space<vmem>>, vector<1x1x8x288xf32>
    %36 = vector.shape_cast %35 : vector<1x1x8x288xf32> to vector<8x288xf32>
    %37 = vector.extract_strided_slice %36 {offsets = [0, 0], sizes = [8, 256], strides = [1, 1]} : vector<8x288xf32> to vector<8x256xf32>
    %c6 = arith.constant 6 : index
    %c0_30 = arith.constant 0 : index
    %c0_31 = arith.constant 0 : index
    %38 = vector.load %arg2[%c6, %c0_30, %c0_31] : memref<9x8x8xf32, #tpu.memory_space<vmem>>, vector<1x8x8xf32>
    %39 = vector.shape_cast %38 : vector<1x8x8xf32> to vector<8x8xf32>
    %cst_32 = arith.constant dense<0.000000e+00> : vector<8x256xf32>
    %40 = tpu.matmul %39, %37, %cst_32 {dimension_numbers = #tpu.dot_dimension_numbers<[1], [0], [0], [1], [0, 0, 1, 1], [], []>} : vector<8x8xf32>, vector<8x256xf32>, vector<8x256xf32> -> vector<8x256xf32>
    %41 = arith.addf %34, %40 : vector<8x256xf32>
    %42 = vector.extract_strided_slice %36 {offsets = [0, 16], sizes = [8, 256], strides = [1, 1]} : vector<8x288xf32> to vector<8x256xf32>
    %c7 = arith.constant 7 : index
    %c0_33 = arith.constant 0 : index
    %c0_34 = arith.constant 0 : index
    %43 = vector.load %arg2[%c7, %c0_33, %c0_34] : memref<9x8x8xf32, #tpu.memory_space<vmem>>, vector<1x8x8xf32>
    %44 = vector.shape_cast %43 : vector<1x8x8xf32> to vector<8x8xf32>
    %cst_35 = arith.constant dense<0.000000e+00> : vector<8x256xf32>
    %45 = tpu.matmul %44, %42, %cst_35 {dimension_numbers = #tpu.dot_dimension_numbers<[1], [0], [0], [1], [0, 0, 1, 1], [], []>} : vector<8x8xf32>, vector<8x256xf32>, vector<8x256xf32> -> vector<8x256xf32>
    %46 = arith.addf %41, %45 : vector<8x256xf32>
    %47 = vector.extract_strided_slice %36 {offsets = [0, 32], sizes = [8, 256], strides = [1, 1]} : vector<8x288xf32> to vector<8x256xf32>
    %c8 = arith.constant 8 : index
    %c0_36 = arith.constant 0 : index
    %c0_37 = arith.constant 0 : index
    %48 = vector.load %arg2[%c8, %c0_36, %c0_37] : memref<9x8x8xf32, #tpu.memory_space<vmem>>, vector<1x8x8xf32>
    %49 = vector.shape_cast %48 : vector<1x8x8xf32> to vector<8x8xf32>
    %cst_38 = arith.constant dense<0.000000e+00> : vector<8x256xf32>
    %50 = tpu.matmul %49, %47, %cst_38 {dimension_numbers = #tpu.dot_dimension_numbers<[1], [0], [0], [1], [0, 0, 1, 1], [], []>} : vector<8x8xf32>, vector<8x256xf32>, vector<8x256xf32> -> vector<8x256xf32>
    %51 = arith.addf %46, %50 : vector<8x256xf32>
    %c0_39 = arith.constant 0 : index
    %c0_40 = arith.constant 0 : index
    %52 = vector.load %arg3[%c0_39, %c0_40] : memref<8x1xf32, #tpu.memory_space<vmem>>, vector<8x1xf32>
    %53 = vector.broadcast %52 : vector<8x1xf32> to vector<8x256xf32>
    %54 = arith.addf %51, %53 : vector<8x256xf32>
    %cst_41 = arith.constant 2.000000e+01 : f32
    %55 = vector.broadcast %cst_41 : f32 to vector<8x256xf32>
    %56 = arith.minimumf %54, %55 : vector<8x256xf32>
    %57 = math.exp %56 : vector<8x256xf32>
    %cst_42 = arith.constant 1.000000e+00 : f32
    %58 = vector.broadcast %cst_42 : f32 to vector<8x256xf32>
    %59 = arith.addf %58, %57 : vector<8x256xf32>
    %cst_43 = arith.constant 1.000000e+00 : f32
    %60 = vector.broadcast %cst_43 : f32 to vector<8x256xf32>
    %61 = arith.addf %60, %57 : vector<8x256xf32>
    %62 = arith.mulf %59, %61 : vector<8x256xf32>
    %cst_44 = arith.constant 1.000000e+00 : f32
    %63 = vector.broadcast %cst_44 : f32 to vector<8x256xf32>
    %64 = arith.subf %62, %63 : vector<8x256xf32>
    %65 = arith.mulf %54, %64 : vector<8x256xf32>
    %cst_45 = arith.constant 1.000000e+00 : f32
    %66 = vector.broadcast %cst_45 : f32 to vector<8x256xf32>
    %67 = arith.addf %62, %66 : vector<8x256xf32>
    %68 = tpu.reciprocal %67 {approx = true} : vector<8x256xf32> -> vector<8x256xf32>
    %69 = arith.mulf %65, %68 : vector<8x256xf32>
    %cst_46 = arith.constant 2.000000e+01 : f32
    %70 = vector.broadcast %cst_46 : f32 to vector<8x256xf32>
    %71 = arith.cmpf ogt, %54, %70 : vector<8x256xf32>
    %72 = arith.select %71, %54, %69 : vector<8x256xi1>, vector<8x256xf32>
    %c0_47 = arith.constant 0 : index
    %c0_48 = arith.constant 0 : index
    %c0_49 = arith.constant 0 : index
    %73 = vector.load %arg4[%c0_47, %c0_48, %c0_49] : memref<1x8x256xf32, #tpu.memory_space<vmem>>, vector<1x8x256xf32>
    %74 = vector.shape_cast %73 : vector<1x8x256xf32> to vector<8x256xf32>
    %75 = vector.shape_cast %72 : vector<8x256xf32> to vector<1x8x256xf32>
    tpu.vector_store %arg4[%c0_47, %c0_48, %c0_49], %75 {strides = array<i32>} : memref<1x8x256xf32, #tpu.memory_space<vmem>>, vector<1x8x256xf32>,
    return
  }
  func.func @transform_0(%arg0: i32) -> (i32, i32, i32, i32) {
    %c0_i32 = arith.constant 0 : i32
    %c0_i32_0 = arith.constant 0 : i32
    %c0_i32_1 = arith.constant 0 : i32
    %c0_i32_2 = arith.constant 0 : i32
    return %arg0, %c0_i32, %c0_i32_0, %c0_i32_1 : i32, i32, i32, i32
  }
  func.func @transform_1(%arg0: i32) -> (i32, i32, i32) {
    %c0_i32 = arith.constant 0 : i32
    %c0_i32_0 = arith.constant 0 : i32
    %c0_i32_1 = arith.constant 0 : i32
    %c0_i32_2 = arith.constant 0 : i32
    return %c0_i32, %c0_i32_0, %c0_i32_1 : i32, i32, i32
  }
  func.func @transform_2(%arg0: i32) -> (i32, i32) {
    %c0_i32 = arith.constant 0 : i32
    %c0_i32_0 = arith.constant 0 : i32
    %c0_i32_1 = arith.constant 0 : i32
    return %c0_i32, %c0_i32_0 : i32, i32
  }
  func.func @transform_3(%arg0: i32) -> (i32, i32, i32) {
    %c0_i32 = arith.constant 0 : i32
    %c0_i32_0 = arith.constant 0 : i32
    %c0_i32_1 = arith.constant 0 : i32
    return %arg0, %c0_i32, %c0_i32_0 : i32, i32, i32
  }
}

</mosaic_0001>

<llo_original>
// kernel: conv_layer3_forward.1
$region0: #{conv_layer3_forward.1}
  #allocation0 [shape = 'u32[]', space=smem, size = 0x4, offset = 0x4, fixed_abs, tag = 'smem constant byte address 0x4 - core index']
  #allocation1 [shape = 'u32[144,128]{1,0:T(1,128)}', space=vmem, size = 0x12000, scoped, tag = 'internal scratch']
  %s0 = inlined_call_operand.vmem [shape: f32[2,3,8,288], index: 0, kind: input, shape index: {}]
  %s1 = inlined_call_operand.vmem [shape: f32[9,8,8], index: 1, kind: input, shape index: {}]
  %s2 = inlined_call_operand.vmem [shape: f32[8,1], index: 2, kind: input, shape index: {}]
  %s3 = inlined_call_operand.vmem [shape: f32[2,8,256], index: 3, kind: output, shape index: {}]
  %s4 = sld [smem:[#allocation0]]
  $region45: #{conv_layer3_forward.1} parent=0
    _
  %s6 = ssub.s32 1, %s4
  %s7 = scalar_select 0, %s6, %s4
  loop: start=0, step=1, limit=4
  $region2: #{conv_layer3_forward.1} parent=0 // loop_pre_header
    _
  $region3: #{conv_layer3_forward.1} parent=0 // loop_header
    %s9 = sphi 0, %s13
    %p10 = scmp.ge.s32.totalorder %s9, 4
    %s19 = sphi 0, %s21
    %s22 = sphi 0, %s19
    %s23 = sphi 0, %s22
    %s39 = sphi 0, %s23
    %s43 = sphi 0, %s43
    %s45 = sphi 0, %s43
    %s46 = sphi 0, %s45
    %s60 = sphi 0, %s46
    %s64 = sphi 0, %s64
    %s66 = sphi 0, %s64
    %s67 = sphi 0, %s66
    %s81 = sphi 0, %s67
    %s87 = sphi 0, %s89
    %s90 = sphi 0, %s87
    %s91 = sphi 0, %s90
    %s107 = sphi 0, %s91
  $region4: #{conv_layer3_forward.1} parent=0 // loop_header_branch
    %12 = sbr.rel (%p10) target = $region8
  $region5: #{conv_layer3_forward.1} parent=0 // loop_body
    %s14 = ssub.s32 %s9, 1
    %s15 = ssub.s32 %s9, 2
    %s16 = sadd.s32 %s9, 1
    %s17 = ssub.s32 %s9, %s16
    %p18 = scmp.eq.s32.totalorder %s17, 0
    %s20 = sadd.s32 %s19, 1
    %s21 = scalar_select %p18, %s19, %s20
    %p24 = pneg %p18
    %p25 = scmp.eq.s32.totalorder %s9, 1
    %p26 = por %p24, %p25
    %p27 = scmp.ne.s32.totalorder %s19, %s22
    %p28 = scmp.eq.s32.totalorder %s9, 0
    %p29 = por %p27, %p28
    %p30 = scmp.ne.s32.totalorder %s19, %s22
    %p31 = scmp.eq.s32.totalorder %s14, 1
    %p32 = por %p30, %p31
    %p33 = scmp.ne.s32.totalorder %s22, %s23
    %p34 = scmp.eq.s32.totalorder %s14, 0
    %p35 = por %p33, %p34
    %p36 = scmp.ne.s32.totalorder %s22, %s23
    %p37 = scmp.eq.s32.totalorder %s15, 1
    %p38 = por %p36, %p37
    %p40 = scmp.ne.s32.totalorder %s23, %s39
    %p41 = scmp.eq.s32.totalorder %s15, 0
    %p42 = por %p40, %p41
    %s44 = sadd.s32 %s43, 1
    %p47 = scmp.eq.s32.totalorder %s9, 1
    %p48 = scmp.ne.s32.totalorder %s43, %s45
    %p49 = scmp.eq.s32.totalorder %s9, 0
    %p50 = por %p48, %p49
    %p51 = scmp.ne.s32.totalorder %s43, %s45
    %p52 = scmp.eq.s32.totalorder %s14, 1
    %p53 = por %p51, %p52
    %p54 = scmp.ne.s32.totalorder %s45, %s46
    %p55 = scmp.eq.s32.totalorder %s14, 0
    %p56 = por %p54, %p55
    %p57 = scmp.ne.s32.totalorder %s45, %s46
    %p58 = scmp.eq.s32.totalorder %s15, 1
    %p59 = por %p57, %p58
    %p61 = scmp.ne.s32.totalorder %s46, %s60
    %p62 = scmp.eq.s32.totalorder %s15, 0
    %p63 = por %p61, %p62
    %s65 = sadd.s32 %s64, 1
    %p68 = scmp.eq.s32.totalorder %s9, 1
    %p69 = scmp.ne.s32.totalorder %s64, %s66
    %p70 = scmp.eq.s32.totalorder %s9, 0
    %p71 = por %p69, %p70
    %p72 = scmp.ne.s32.totalorder %s64, %s66
    %p73 = scmp.eq.s32.totalorder %s14, 1
    %p74 = por %p72, %p73
    %p75 = scmp.ne.s32.totalorder %s66, %s67
    %p76 = scmp.eq.s32.totalorder %s14, 0
    %p77 = por %p75, %p76
    %p78 = scmp.ne.s32.totalorder %s66, %s67
    %p79 = scmp.eq.s32.totalorder %s15, 1
    %p80 = por %p78, %p79
    %p82 = scmp.ne.s32.totalorder %s67, %s81
    %p83 = scmp.eq.s32.totalorder %s15, 0
    %p84 = por %p82, %p83
    %s85 = ssub.s32 %s9, %s16
    %p86 = scmp.eq.s32.totalorder %s85, 0
    %s88 = sadd.s32 %s87, 1
    %s89 = scalar_select %p86, %s87, %s88
    %p92 = pneg %p86
    %p93 = scmp.eq.s32.totalorder %s9, 1
    %p94 = por %p92, %p93
    %p95 = scmp.ne.s32.totalorder %s87, %s90
    %p96 = scmp.eq.s32.totalorder %s9, 0
    %p97 = por %p95, %p96
    %p98 = scmp.ne.s32.totalorder %s87, %s90
    %p99 = scmp.eq.s32.totalorder %s14, 1
    %p100 = por %p98, %p99
    %p101 = scmp.ne.s32.totalorder %s90, %s91
    %p102 = scmp.eq.s32.totalorder %s14, 0
    %p103 = por %p101, %p102
    %p104 = scmp.ne.s32.totalorder %s90, %s91
    %p105 = scmp.eq.s32.totalorder %s15, 1
    %p106 = por %p104, %p105
    %p108 = scmp.ne.s32.totalorder %s91, %s107
    %p109 = scmp.eq.s32.totalorder %s15, 0
    %p110 = por %p108, %p109
    %p111 = scmp.le.s32.totalorder 1, %s9
    %p112 = scmp.lt.s32.totalorder %s9, 3
    %p113 = pnand %p111, %p112
    %p114 = pneg %p113
    // Predicated region
    $region9: #{conv_layer3_forward.1} parent=5 // pred_check
      _
    $region10: #{conv_layer3_forward.1} parent=5 // pred_check_branch
      %116 = sbr.rel (%p113) target = $region12
    $region11: #{conv_layer3_forward.1} parent=5 // pred_region
      %s117 = ssub.s32 %s9, 1
      // Predicated region
      $region13: #{conv_layer3_forward.1} parent=11 // pred_check
        %p118 = pneg %p56
      $region14: #{conv_layer3_forward.1} parent=11 // pred_check_branch
        %120 = sbr.rel (%p118) target = $region16
      $region15: #{conv_layer3_forward.1} parent=11 // pred_region
        _
      $region16: #{conv_layer3_forward.1} parent=11 // pred_fallthru
        _
      // Predicated region
      $region17: #{conv_layer3_forward.1} parent=11 // pred_check
        %p121 = pneg %p77
      $region18: #{conv_layer3_forward.1} parent=11 // pred_check_branch
        %123 = sbr.rel (%p121) target = $region20
      $region19: #{conv_layer3_forward.1} parent=11 // pred_region
        _
      $region20: #{conv_layer3_forward.1} parent=11 // pred_fallthru
        _
    $region12: #{conv_layer3_forward.1} parent=5 // pred_fallthru
      _
    %p124 = scmp.lt.s32.totalorder %s9, 2
    // Predicated region
    $region21: #{conv_layer3_forward.1} parent=5 // pred_check
      %p125 = pneg %p124
    $region22: #{conv_layer3_forward.1} parent=5 // pred_check_branch
      %127 = sbr.rel (%p125) target = $region24
    $region23: #{conv_layer3_forward.1} parent=5 // pred_region
      // Predicated region
      $region25: #{conv_layer3_forward.1} parent=23 // pred_check
        %p128 = pneg %p29
      $region26: #{conv_layer3_forward.1} parent=23 // pred_check_branch
        %130 = sbr.rel (%p128) target = $region28
      $region27: #{conv_layer3_forward.1} parent=23 // pred_region
        %p131 = scmp.lt.s32.totalorder %s9, 1
        %s132 = scalar_select %p131, %s9, 1
        %s133 = smul.addr %s132, 9
        %s134 = smul.addr %s133, 8
        %s135 = scalar_lea.vmem %s0, %s134
      $region28: #{conv_layer3_forward.1} parent=23 // pred_fallthru
        _
    $region24: #{conv_layer3_forward.1} parent=5 // pred_fallthru
      _
    %p136 = scmp.le.s32.totalorder 1, %s9
    %p137 = scmp.lt.s32.totalorder %s9, 3
    %p138 = pnand %p136, %p137
    %p139 = pneg %p138
    // Predicated region
    $region29: #{conv_layer3_forward.1} parent=5 // pred_check
      _
    $region30: #{conv_layer3_forward.1} parent=5 // pred_check_branch
      %141 = sbr.rel (%p138) target = $region32
    $region31: #{conv_layer3_forward.1} parent=5 // pred_region
      %s142 = ssub.s32 %s9, 1
      %p143 = scmp.lt.s32.totalorder %s14, 1
      %s144 = scalar_select %p143, %s14, 1
      %s145 = smul.addr %s144, 9
      %s146 = smul.addr %s145, 8
      %s147 = scalar_lea.vmem %s0, %s146
      %p148 = pneg %p35
      %p149 = pneg %p32
      %p150 = pneg %p56
      %p151 = pneg %p53
      %p152 = pneg %p77
      %p153 = pneg %p74
      %p154 = pneg %p103
      %p155 = pneg %p100
      %p156 = scmp.lt.s32.totalorder %s14, 1
      %s157 = scalar_select %p156, %s14, 1
      %s158 = smul.addr %s157, 2
      %s159 = smul.addr %s158, 8
      %s160 = scalar_lea.vmem %s3, %s159
      %p161 = scmp.lt.s32.totalorder %s14, 1
      %s162 = scalar_select %p161, %s14, 1
      %s163 = smul.addr %s162, 9
      %s164 = smul.addr %s163, 8
      %s165 = scalar_lea.vmem %s0, %s164
      %p166 = scmp.lt.s32.totalorder %s14, 1
      %s167 = scalar_select %p166, %s14, 1
      %s168 = smul.addr %s167, 2
      %s169 = smul.addr %s168, 8
      %s170 = scalar_lea.vmem %s3, %s169
      %v171 = vld [vmem:[%s165] sm:$0xff]
      %v172 = vld [vmem:[%s165 + $0x8] sm:$0xff]
      %v173 = vld [vmem:[%s165 + $0x10] sm:$0xff]
      %v174 = vld [vmem:[%s1] sm:$0xff]
      %s175 = scalar_lea.vmem %s1, 8
      %v176 = vld [vmem:[%s175] sm:$0xff]
      %180 = vrot.lane.b32.xlu0 %v171, 112
      %v181 = vpop.permute.xlu0 %180
      %182 = vrot.lane.b32.xlu0 %v172, 112
      %v183 = vpop.permute.xlu0 %182
      %184 = vrot.lane.b32.xlu0 %v173, 112
      %v185 = vpop.permute.xlu0 %184
      %vm186 = vcmask 916480
      %v187 = vsel %vm186, %v181, %v183
      %v188 = vsel %vm186, %v183, %v185
      %vm191 = vcmask 64512
      %v193 = vsel %vm191, %v176, 0
      %195 = vmatprep.subr.mxu0 0.0
      %196 = vmatpush1.msra.mxu0 0.0
      %197 = vmatprep.subr.mxu0 0.0
      %198 = vmatpush1.msra.mxu0 0.0
      %199 = vmatprep.subr.mxu0 0.0
      %200 = vmatpush1.msra.mxu0 0.0
      %201 = vmatprep.subr.mxu0 0.0
      %202 = vmatpush1.msra.mxu0 0.0
      %203 = vmatprep.subr.mxu0 0.0
      %204 = vmatpush1.msra.mxu0 0.0
      %205 = vmatprep.subr.mxu0 0.0
      %206 = vmatpush1.msra.mxu0 0.0
      %207 = vmatprep.subr.mxu0 0.0
      %208 = vmatpush1.msra.mxu0 0.0
      %209 = vmatprep.subr.mxu0 0.0
      %210 = vmatpush1.msra.mxu0 0.0
      %211 = vmatprep.subr.mxu0 0.0
      %212 = vmatpush1.msra.mxu0 0.0
      %213 = vmatprep.subr.mxu0 0.0
      %214 = vmatpush1.msra.mxu0 0.0
      %215 = vmatprep.subr.mxu0 0.0
      %216 = vmatpush1.msra.mxu0 0.0
      %217 = vmatprep.subr.mxu0 0.0
      %218 = vmatpush1.msra.mxu0 0.0
      %219 = vmatprep.subr.mxu0 0.0
      %220 = vmatpush1.msra.mxu0 0.0
      %221 = vmatprep.subr.mxu0 0.0
      %222 = vmatpush1.msra.mxu0 0.0
      %223 = vmatprep.subr.mxu0 0.0
      %224 = vmatpush1.msra.mxu0 0.0
      %225 = vmatprep.subr.mxu0 %v188
      %226 = vmatpush1.msra.mxu0 %v187
      %227 = vmatprep.subr.mxu0 0.0
      %228 = vmatpush2.msra.mxu0 0.0
      %229 = vmatprep.subr.mxu0 0.0
      %230 = vmatpush2.msra.mxu0 0.0
      %231 = vmatprep.subr.mxu0 0.0
      %232 = vmatpush2.msra.mxu0 0.0
      %233 = vmatprep.subr.mxu0 0.0
      %234 = vmatpush2.msra.mxu0 0.0
      %235 = vmatprep.subr.mxu0 0.0
      %236 = vmatpush2.msra.mxu0 0.0
      %237 = vmatprep.subr.mxu0 0.0
      %238 = vmatpush2.msra.mxu0 0.0
      %239 = vmatprep.subr.mxu0 0.0
      %240 = vmatpush2.msra.mxu0 0.0
      %241 = vmatprep.subr.mxu0 0.0
      %242 = vmatpush2.msra.mxu0 0.0
      %243 = vmatprep.subr.mxu0 0.0
      %244 = vmatpush2.msra.mxu0 0.0
      %245 = vmatprep.subr.mxu0 0.0
      %246 = vmatpush2.msra.mxu0 0.0
      %247 = vmatprep.subr.mxu0 0.0
      %248 = vmatpush2.msra.mxu0 0.0
      %249 = vmatprep.subr.mxu0 0.0
      %250 = vmatpush2.msra.mxu0 0.0
      %251 = vmatprep.subr.mxu0 0.0
      %252 = vmatpush2.msra.mxu0 0.0
      %253 = vmatprep.subr.mxu0 0.0
      %254 = vmatpush2.msra.mxu0 0.0
      %255 = vmatprep.subr.mxu0 0.0
      %256 = vmatpush2.msra.mxu0 0.0
      %257 = vmatprep.subr.mxu0 0.0
      %258 = vmatpush2.msra.mxu0 0.0
      %259 = vmatprep.mubr.f32.mxu0 0.0
      %260 = vmatmul.mubr.f32.gmra.mxu0 %v193
      %v261 = vpop.f32.mrf.mxu0
      %v262 = vadd.f32 0.0, %v261
      %v263 = vpop.f32.mrf.mxu0
      %v264 = vadd.f32 0.0, %v263
      %265 = vdwg.mxu0
      %v267 = vsel %vm191, %v174, 0
      %269 = vmatprep.subr.mxu0 0.0
      %270 = vmatpush1.msra.mxu0 0.0
      %271 = vmatprep.subr.mxu0 0.0
      %272 = vmatpush1.msra.mxu0 0.0
      %273 = vmatprep.subr.mxu0 0.0
      %274 = vmatpush1.msra.mxu0 0.0
      %275 = vmatprep.subr.mxu0 0.0
      %276 = vmatpush1.msra.mxu0 0.0
      %277 = vmatprep.subr.mxu0 0.0
      %278 = vmatpush1.msra.mxu0 0.0
      %279 = vmatprep.subr.mxu0 0.0
      %280 = vmatpush1.msra.mxu0 0.0
      %281 = vmatprep.subr.mxu0 0.0
      %282 = vmatpush1.msra.mxu0 0.0
      %283 = vmatprep.subr.mxu0 0.0
      %284 = vmatpush1.msra.mxu0 0.0
      %285 = vmatprep.subr.mxu0 0.0
      %286 = vmatpush1.msra.mxu0 0.0
      %287 = vmatprep.subr.mxu0 0.0
      %288 = vmatpush1.msra.mxu0 0.0
      %289 = vmatprep.subr.mxu0 0.0
      %290 = vmatpush1.msra.mxu0 0.0
      %291 = vmatprep.subr.mxu0 0.0
      %292 = vmatpush1.msra.mxu0 0.0
      %293 = vmatprep.subr.mxu0 0.0
      %294 = vmatpush1.msra.mxu0 0.0
      %295 = vmatprep.subr.mxu0 0.0
      %296 = vmatpush1.msra.mxu0 0.0
      %297 = vmatprep.subr.mxu0 0.0
      %298 = vmatpush1.msra.mxu0 0.0
      %299 = vmatprep.subr.mxu0 %v172
      %300 = vmatpush1.msra.mxu0 %v171
      %301 = vmatprep.subr.mxu0 0.0
      %302 = vmatpush2.msra.mxu0 0.0
      %303 = vmatprep.subr.mxu0 0.0
      %304 = vmatpush2.msra.mxu0 0.0
      %305 = vmatprep.subr.mxu0 0.0
      %306 = vmatpush2.msra.mxu0 0.0
      %307 = vmatprep.subr.mxu0 0.0
      %308 = vmatpush2.msra.mxu0 0.0
      %309 = vmatprep.subr.mxu0 0.0
      %310 = vmatpush2.msra.mxu0 0.0
      %311 = vmatprep.subr.mxu0 0.0
      %312 = vmatpush2.msra.mxu0 0.0
      %313 = vmatprep.subr.mxu0 0.0
      %314 = vmatpush2.msra.mxu0 0.0
      %315 = vmatprep.subr.mxu0 0.0
      %316 = vmatpush2.msra.mxu0 0.0
      %317 = vmatprep.subr.mxu0 0.0
      %318 = vmatpush2.msra.mxu0 0.0
      %319 = vmatprep.subr.mxu0 0.0
      %320 = vmatpush2.msra.mxu0 0.0
      %321 = vmatprep.subr.mxu0 0.0
      %322 = vmatpush2.msra.mxu0 0.0
      %323 = vmatprep.subr.mxu0 0.0
      %324 = vmatpush2.msra.mxu0 0.0
      %325 = vmatprep.subr.mxu0 0.0
      %326 = vmatpush2.msra.mxu0 0.0
      %327 = vmatprep.subr.mxu0 0.0
      %328 = vmatpush2.msra.mxu0 0.0
      %329 = vmatprep.subr.mxu0 0.0
      %330 = vmatpush2.msra.mxu0 0.0
      %331 = vmatprep.subr.mxu0 0.0
      %332 = vmatpush2.msra.mxu0 0.0
      %333 = vmatprep.mubr.f32.mxu0 0.0
      %334 = vmatmul.mubr.f32.gmra.mxu0 %v267
      %v335 = vpop.f32.mrf.mxu0
      %v336 = vadd.f32 %v262, %v335
      %v337 = vpop.f32.mrf.mxu0
      %v338 = vadd.f32 %v264, %v337
      %339 = vdwg.mxu0
      %s340 = scalar_lea.vmem %s1, 16
      %v341 = vld [vmem:[%s340] sm:$0xff]
      %342 = vrot.lane.b32.xlu0 %v171, 96
      %v343 = vpop.permute.xlu0 %342
      %344 = vrot.lane.b32.xlu0 %v172, 96
      %v345 = vpop.permute.xlu0 %344
      %346 = vrot.lane.b32.xlu0 %v173, 96
      %v347 = vpop.permute.xlu0 %346
      %vm348 = vcmask 785408
      %v349 = vsel %vm348, %v343, %v345
      %v350 = vsel %vm348, %v345, %v347
      %v354 = vsel %vm191, %v341, 0
      %356 = vmatprep.subr.mxu0 0.0
      %357 = vmatpush1.msra.mxu0 0.0
      %358 = vmatprep.subr.mxu0 0.0
      %359 = vmatpush1.msra.mxu0 0.0
      %360 = vmatprep.subr.mxu0 0.0
      %361 = vmatpush1.msra.mxu0 0.0
      %362 = vmatprep.subr.mxu0 0.0
      %363 = vmatpush1.msra.mxu0 0.0
      %364 = vmatprep.subr.mxu0 0.0
      %365 = vmatpush1.msra.mxu0 0.0
      %366 = vmatprep.subr.mxu0 0.0
      %367 = vmatpush1.msra.mxu0 0.0
      %368 = vmatprep.subr.mxu0 0.0
      %369 = vmatpush1.msra.mxu0 0.0
      %370 = vmatprep.subr.mxu0 0.0
      %371 = vmatpush1.msra.mxu0 0.0
      %372 = vmatprep.subr.mxu0 0.0
      %373 = vmatpush1.msra.mxu0 0.0
      %374 = vmatprep.subr.mxu0 0.0
      %375 = vmatpush1.msra.mxu0 0.0
      %376 = vmatprep.subr.mxu0 0.0
      %377 = vmatpush1.msra.mxu0 0.0
      %378 = vmatprep.subr.mxu0 0.0
      %379 = vmatpush1.msra.mxu0 0.0
      %380 = vmatprep.subr.mxu0 0.0
      %381 = vmatpush1.msra.mxu0 0.0
      %382 = vmatprep.subr.mxu0 0.0
      %383 = vmatpush1.msra.mxu0 0.0
      %384 = vmatprep.subr.mxu0 0.0
      %385 = vmatpush1.msra.mxu0 0.0
      %386 = vmatprep.subr.mxu0 %v350
      %387 = vmatpush1.msra.mxu0 %v349
      %388 = vmatprep.subr.mxu0 0.0
      %389 = vmatpush2.msra.mxu0 0.0
      %390 = vmatprep.subr.mxu0 0.0
      %391 = vmatpush2.msra.mxu0 0.0
      %392 = vmatprep.subr.mxu0 0.0
      %393 = vmatpush2.msra.mxu0 0.0
      %394 = vmatprep.subr.mxu0 0.0
      %395 = vmatpush2.msra.mxu0 0.0
      %396 = vmatprep.subr.mxu0 0.0
      %397 = vmatpush2.msra.mxu0 0.0
      %398 = vmatprep.subr.mxu0 0.0
      %399 = vmatpush2.msra.mxu0 0.0
      %400 = vmatprep.subr.mxu0 0.0
      %401 = vmatpush2.msra.mxu0 0.0
      %402 = vmatprep.subr.mxu0 0.0
      %403 = vmatpush2.msra.mxu0 0.0
      %404 = vmatprep.subr.mxu0 0.0
      %405 = vmatpush2.msra.mxu0 0.0
      %406 = vmatprep.subr.mxu0 0.0
      %407 = vmatpush2.msra.mxu0 0.0
      %408 = vmatprep.subr.mxu0 0.0
      %409 = vmatpush2.msra.mxu0 0.0
      %410 = vmatprep.subr.mxu0 0.0
      %411 = vmatpush2.msra.mxu0 0.0
      %412 = vmatprep.subr.mxu0 0.0
      %413 = vmatpush2.msra.mxu0 0.0
      %414 = vmatprep.subr.mxu0 0.0
      %415 = vmatpush2.msra.mxu0 0.0
      %416 = vmatprep.subr.mxu0 0.0
      %417 = vmatpush2.msra.mxu0 0.0
      %418 = vmatprep.subr.mxu0 0.0
      %419 = vmatpush2.msra.mxu0 0.0
      %420 = vmatprep.mubr.f32.mxu0 0.0
      %421 = vmatmul.mubr.f32.gmra.mxu0 %v354
      %v422 = vpop.f32.mrf.mxu0
      %v423 = vadd.f32 0.0, %v422
      %v424 = vpop.f32.mrf.mxu0
      %v425 = vadd.f32 0.0, %v424
      %426 = vdwg.mxu0
      %v427 = vadd.f32 %v336, %v423
      %v428 = vadd.f32 %v338, %v425
      %s429 = scalar_lea.vmem %s165, 24
      %v430 = vld [vmem:[%s429] sm:$0xff]
      %v431 = vld [vmem:[%s429 + $0x8] sm:$0xff]
      %v432 = vld [vmem:[%s429 + $0x10] sm:$0xff]
      %s433 = scalar_lea.vmem %s1, 24
      %v434 = vld [vmem:[%s433] sm:$0xff]
      %v436 = vsel %vm191, %v434, 0
      %438 = vmatprep.subr.mxu0 0.0
      %439 = vmatpush1.msra.mxu0 0.0
      %440 = vmatprep.subr.mxu0 0.0
      %441 = vmatpush1.msra.mxu0 0.0
      %442 = vmatprep.subr.mxu0 0.0
      %443 = vmatpush1.msra.mxu0 0.0
      %444 = vmatprep.subr.mxu0 0.0
      %445 = vmatpush1.msra.mxu0 0.0
      %446 = vmatprep.subr.mxu0 0.0
      %447 = vmatpush1.msra.mxu0 0.0
      %448 = vmatprep.subr.mxu0 0.0
      %449 = vmatpush1.msra.mxu0 0.0
      %450 = vmatprep.subr.mxu0 0.0
      %451 = vmatpush1.msra.mxu0 0.0
      %452 = vmatprep.subr.mxu0 0.0
      %453 = vmatpush1.msra.mxu0 0.0
      %454 = vmatprep.subr.mxu0 0.0
      %455 = vmatpush1.msra.mxu0 0.0
      %456 = vmatprep.subr.mxu0 0.0
      %457 = vmatpush1.msra.mxu0 0.0
      %458 = vmatprep.subr.mxu0 0.0
      %459 = vmatpush1.msra.mxu0 0.0
      %460 = vmatprep.subr.mxu0 0.0
      %461 = vmatpush1.msra.mxu0 0.0
      %462 = vmatprep.subr.mxu0 0.0
      %463 = vmatpush1.msra.mxu0 0.0
      %464 = vmatprep.subr.mxu0 0.0
      %465 = vmatpush1.msra.mxu0 0.0
      %466 = vmatprep.subr.mxu0 0.0
      %467 = vmatpush1.msra.mxu0 0.0
      %468 = vmatprep.subr.mxu0 %v431
      %469 = vmatpush1.msra.mxu0 %v430
      %470 = vmatprep.subr.mxu0 0.0
      %471 = vmatpush2.msra.mxu0 0.0
      %472 = vmatprep.subr.mxu0 0.0
      %473 = vmatpush2.msra.mxu0 0.0
      %474 = vmatprep.subr.mxu0 0.0
      %475 = vmatpush2.msra.mxu0 0.0
      %476 = vmatprep.subr.mxu0 0.0
      %477 = vmatpush2.msra.mxu0 0.0
      %478 = vmatprep.subr.mxu0 0.0
      %479 = vmatpush2.msra.mxu0 0.0
      %480 = vmatprep.subr.mxu0 0.0
      %481 = vmatpush2.msra.mxu0 0.0
      %482 = vmatprep.subr.mxu0 0.0
      %483 = vmatpush2.msra.mxu0 0.0
      %484 = vmatprep.subr.mxu0 0.0
      %485 = vmatpush2.msra.mxu0 0.0
      %486 = vmatprep.subr.mxu0 0.0
      %487 = vmatpush2.msra.mxu0 0.0
      %488 = vmatprep.subr.mxu0 0.0
      %489 = vmatpush2.msra.mxu0 0.0
      %490 = vmatprep.subr.mxu0 0.0
      %491 = vmatpush2.msra.mxu0 0.0
      %492 = vmatprep.subr.mxu0 0.0
      %493 = vmatpush2.msra.mxu0 0.0
      %494 = vmatprep.subr.mxu0 0.0
      %495 = vmatpush2.msra.mxu0 0.0
      %496 = vmatprep.subr.mxu0 0.0
      %497 = vmatpush2.msra.mxu0 0.0
      %498 = vmatprep.subr.mxu0 0.0
      %499 = vmatpush2.msra.mxu0 0.0
      %500 = vmatprep.subr.mxu0 0.0
      %501 = vmatpush2.msra.mxu0 0.0
      %502 = vmatprep.mubr.f32.mxu0 0.0
      %503 = vmatmul.mubr.f32.gmra.mxu0 %v436
      %v504 = vpop.f32.mrf.mxu0
      %v505 = vadd.f32 0.0, %v504
      %v506 = vpop.f32.mrf.mxu0
      %v507 = vadd.f32 0.0, %v506
      %508 = vdwg.mxu0
      %v509 = vadd.f32 %v427, %v505
      %v510 = vadd.f32 %v428, %v507
      %s511 = scalar_lea.vmem %s1, 32
      %v512 = vld [vmem:[%s511] sm:$0xff]
      %516 = vrot.lane.b32.xlu0 %v430, 112
      %v517 = vpop.permute.xlu0 %516
      %518 = vrot.lane.b32.xlu0 %v431, 112
      %v519 = vpop.permute.xlu0 %518
      %520 = vrot.lane.b32.xlu0 %v432, 112
      %v521 = vpop.permute.xlu0 %520
      %v522 = vsel %vm186, %v517, %v519
      %v523 = vsel %vm186, %v519, %v521
      %v527 = vsel %vm191, %v512, 0
      %529 = vmatprep.subr.mxu0 0.0
      %530 = vmatpush1.msra.mxu0 0.0
      %531 = vmatprep.subr.mxu0 0.0
      %532 = vmatpush1.msra.mxu0 0.0
      %533 = vmatprep.subr.mxu0 0.0
      %534 = vmatpush1.msra.mxu0 0.0
      %535 = vmatprep.subr.mxu0 0.0
      %536 = vmatpush1.msra.mxu0 0.0
      %537 = vmatprep.subr.mxu0 0.0
      %538 = vmatpush1.msra.mxu0 0.0
      %539 = vmatprep.subr.mxu0 0.0
      %540 = vmatpush1.msra.mxu0 0.0
      %541 = vmatprep.subr.mxu0 0.0
      %542 = vmatpush1.msra.mxu0 0.0
      %543 = vmatprep.subr.mxu0 0.0
      %544 = vmatpush1.msra.mxu0 0.0
      %545 = vmatprep.subr.mxu0 0.0
      %546 = vmatpush1.msra.mxu0 0.0
      %547 = vmatprep.subr.mxu0 0.0
      %548 = vmatpush1.msra.mxu0 0.0
      %549 = vmatprep.subr.mxu0 0.0
      %550 = vmatpush1.msra.mxu0 0.0
      %551 = vmatprep.subr.mxu0 0.0
      %552 = vmatpush1.msra.mxu0 0.0
      %553 = vmatprep.subr.mxu0 0.0
      %554 = vmatpush1.msra.mxu0 0.0
      %555 = vmatprep.subr.mxu0 0.0
      %556 = vmatpush1.msra.mxu0 0.0
      %557 = vmatprep.subr.mxu0 0.0
      %558 = vmatpush1.msra.mxu0 0.0
      %559 = vmatprep.subr.mxu0 %v523
      %560 = vmatpush1.msra.mxu0 %v522
      %561 = vmatprep.subr.mxu0 0.0
      %562 = vmatpush2.msra.mxu0 0.0
      %563 = vmatprep.subr.mxu0 0.0
      %564 = vmatpush2.msra.mxu0 0.0
      %565 = vmatprep.subr.mxu0 0.0
      %566 = vmatpush2.msra.mxu0 0.0
      %567 = vmatprep.subr.mxu0 0.0
      %568 = vmatpush2.msra.mxu0 0.0
      %569 = vmatprep.subr.mxu0 0.0
      %570 = vmatpush2.msra.mxu0 0.0
      %571 = vmatprep.subr.mxu0 0.0
      %572 = vmatpush2.msra.mxu0 0.0
      %573 = vmatprep.subr.mxu0 0.0
      %574 = vmatpush2.msra.mxu0 0.0
      %575 = vmatprep.subr.mxu0 0.0
      %576 = vmatpush2.msra.mxu0 0.0
      %577 = vmatprep.subr.mxu0 0.0
      %578 = vmatpush2.msra.mxu0 0.0
      %579 = vmatprep.subr.mxu0 0.0
      %580 = vmatpush2.msra.mxu0 0.0
      %581 = vmatprep.subr.mxu0 0.0
      %582 = vmatpush2.msra.mxu0 0.0
      %583 = vmatprep.subr.mxu0 0.0
      %584 = vmatpush2.msra.mxu0 0.0
      %585 = vmatprep.subr.mxu0 0.0
      %586 = vmatpush2.msra.mxu0 0.0
      %587 = vmatprep.subr.mxu0 0.0
      %588 = vmatpush2.msra.mxu0 0.0
      %589 = vmatprep.subr.mxu0 0.0
      %590 = vmatpush2.msra.mxu0 0.0
      %591 = vmatprep.subr.mxu0 0.0
      %592 = vmatpush2.msra.mxu0 0.0
      %593 = vmatprep.mubr.f32.mxu0 0.0
      %594 = vmatmul.mubr.f32.gmra.mxu0 %v527
      %v595 = vpop.f32.mrf.mxu0
      %v596 = vadd.f32 0.0, %v595
      %v597 = vpop.f32.mrf.mxu0
      %v598 = vadd.f32 0.0, %v597
      %599 = vdwg.mxu0
      %v600 = vadd.f32 %v509, %v596
      %v601 = vadd.f32 %v510, %v598
      %s602 = scalar_lea.vmem %s1, 40
      %v603 = vld [vmem:[%s602] sm:$0xff]
      %604 = vrot.lane.b32.xlu0 %v430, 96
      %v605 = vpop.permute.xlu0 %604
      %606 = vrot.lane.b32.xlu0 %v431, 96
      %v607 = vpop.permute.xlu0 %606
      %608 = vrot.lane.b32.xlu0 %v432, 96
      %v609 = vpop.permute.xlu0 %608
      %v610 = vsel %vm348, %v605, %v607
      %v611 = vsel %vm348, %v607, %v609
      %v615 = vsel %vm191, %v603, 0
      %617 = vmatprep.subr.mxu0 0.0
      %618 = vmatpush1.msra.mxu0 0.0
      %619 = vmatprep.subr.mxu0 0.0
      %620 = vmatpush1.msra.mxu0 0.0
      %621 = vmatprep.subr.mxu0 0.0
      %622 = vmatpush1.msra.mxu0 0.0
      %623 = vmatprep.subr.mxu0 0.0
      %624 = vmatpush1.msra.mxu0 0.0
      %625 = vmatprep.subr.mxu0 0.0
      %626 = vmatpush1.msra.mxu0 0.0
      %627 = vmatprep.subr.mxu0 0.0
      %628 = vmatpush1.msra.mxu0 0.0
      %629 = vmatprep.subr.mxu0 0.0
      %630 = vmatpush1.msra.mxu0 0.0
      %631 = vmatprep.subr.mxu0 0.0
      %632 = vmatpush1.msra.mxu0 0.0
      %633 = vmatprep.subr.mxu0 0.0
      %634 = vmatpush1.msra.mxu0 0.0
      %635 = vmatprep.subr.mxu0 0.0
      %636 = vmatpush1.msra.mxu0 0.0
      %637 = vmatprep.subr.mxu0 0.0
      %638 = vmatpush1.msra.mxu0 0.0
      %639 = vmatprep.subr.mxu0 0.0
      %640 = vmatpush1.msra.mxu0 0.0
      %641 = vmatprep.subr.mxu0 0.0
      %642 = vmatpush1.msra.mxu0 0.0
      %643 = vmatprep.subr.mxu0 0.0
      %644 = vmatpush1.msra.mxu0 0.0
      %645 = vmatprep.subr.mxu0 0.0
      %646 = vmatpush1.msra.mxu0 0.0
      %647 = vmatprep.subr.mxu0 %v611
      %648 = vmatpush1.msra.mxu0 %v610
      %649 = vmatprep.subr.mxu0 0.0
      %650 = vmatpush2.msra.mxu0 0.0
      %651 = vmatprep.subr.mxu0 0.0
      %652 = vmatpush2.msra.mxu0 0.0
      %653 = vmatprep.subr.mxu0 0.0
      %654 = vmatpush2.msra.mxu0 0.0
      %655 = vmatprep.subr.mxu0 0.0
      %656 = vmatpush2.msra.mxu0 0.0
      %657 = vmatprep.subr.mxu0 0.0
      %658 = vmatpush2.msra.mxu0 0.0
      %659 = vmatprep.subr.mxu0 0.0
      %660 = vmatpush2.msra.mxu0 0.0
      %661 = vmatprep.subr.mxu0 0.0
      %662 = vmatpush2.msra.mxu0 0.0
      %663 = vmatprep.subr.mxu0 0.0
      %664 = vmatpush2.msra.mxu0 0.0
      %665 = vmatprep.subr.mxu0 0.0
      %666 = vmatpush2.msra.mxu0 0.0
      %667 = vmatprep.subr.mxu0 0.0
      %668 = vmatpush2.msra.mxu0 0.0
      %669 = vmatprep.subr.mxu0 0.0
      %670 = vmatpush2.msra.mxu0 0.0
      %671 = vmatprep.subr.mxu0 0.0
      %672 = vmatpush2.msra.mxu0 0.0
      %673 = vmatprep.subr.mxu0 0.0
      %674 = vmatpush2.msra.mxu0 0.0
      %675 = vmatprep.subr.mxu0 0.0
      %676 = vmatpush2.msra.mxu0 0.0
      %677 = vmatprep.subr.mxu0 0.0
      %678 = vmatpush2.msra.mxu0 0.0
      %679 = vmatprep.subr.mxu0 0.0
      %680 = vmatpush2.msra.mxu0 0.0
      %681 = vmatprep.mubr.f32.mxu0 0.0
      %682 = vmatmul.mubr.f32.gmra.mxu0 %v615
      %v683 = vpop.f32.mrf.mxu0
      %v684 = vadd.f32 0.0, %v683
      %v685 = vpop.f32.mrf.mxu0
      %v686 = vadd.f32 0.0, %v685
      %687 = vdwg.mxu0
      %v688 = vadd.f32 %v600, %v684
      %v689 = vadd.f32 %v601, %v686
      %s690 = scalar_lea.vmem %s165, 48
      %v691 = vld [vmem:[%s690] sm:$0xff]
      %v692 = vld [vmem:[%s690 + $0x8] sm:$0xff]
      %v693 = vld [vmem:[%s690 + $0x10] sm:$0xff]
      %s694 = scalar_lea.vmem %s1, 48
      %v695 = vld [vmem:[%s694] sm:$0xff]
      %v697 = vsel %vm191, %v695, 0
      %699 = vmatprep.subr.mxu0 0.0
      %700 = vmatpush1.msra.mxu0 0.0
      %701 = vmatprep.subr.mxu0 0.0
      %702 = vmatpush1.msra.mxu0 0.0
      %703 = vmatprep.subr.mxu0 0.0
      %704 = vmatpush1.msra.mxu0 0.0
      %705 = vmatprep.subr.mxu0 0.0
      %706 = vmatpush1.msra.mxu0 0.0
      %707 = vmatprep.subr.mxu0 0.0
      %708 = vmatpush1.msra.mxu0 0.0
      %709 = vmatprep.subr.mxu0 0.0
      %710 = vmatpush1.msra.mxu0 0.0
      %711 = vmatprep.subr.mxu0 0.0
      %712 = vmatpush1.msra.mxu0 0.0
      %713 = vmatprep.subr.mxu0 0.0
      %714 = vmatpush1.msra.mxu0 0.0
      %715 = vmatprep.subr.mxu0 0.0
      %716 = vmatpush1.msra.mxu0 0.0
      %717 = vmatprep.subr.mxu0 0.0
      %718 = vmatpush1.msra.mxu0 0.0
      %719 = vmatprep.subr.mxu0 0.0
      %720 = vmatpush1.msra.mxu0 0.0
      %721 = vmatprep.subr.mxu0 0.0
      %722 = vmatpush1.msra.mxu0 0.0
      %723 = vmatprep.subr.mxu0 0.0
      %724 = vmatpush1.msra.mxu0 0.0
      %725 = vmatprep.subr.mxu0 0.0
      %726 = vmatpush1.msra.mxu0 0.0
      %727 = vmatprep.subr.mxu0 0.0
      %728 = vmatpush1.msra.mxu0 0.0
      %729 = vmatprep.subr.mxu0 %v692
      %730 = vmatpush1.msra.mxu0 %v691
      %731 = vmatprep.subr.mxu0 0.0
      %732 = vmatpush2.msra.mxu0 0.0
      %733 = vmatprep.subr.mxu0 0.0
      %734 = vmatpush2.msra.mxu0 0.0
      %735 = vmatprep.subr.mxu0 0.0
      %736 = vmatpush2.msra.mxu0 0.0
      %737 = vmatprep.subr.mxu0 0.0
      %738 = vmatpush2.msra.mxu0 0.0
      %739 = vmatprep.subr.mxu0 0.0
      %740 = vmatpush2.msra.mxu0 0.0
      %741 = vmatprep.subr.mxu0 0.0
      %742 = vmatpush2.msra.mxu0 0.0
      %743 = vmatprep.subr.mxu0 0.0
      %744 = vmatpush2.msra.mxu0 0.0
      %745 = vmatprep.subr.mxu0 0.0
      %746 = vmatpush2.msra.mxu0 0.0
      %747 = vmatprep.subr.mxu0 0.0
      %748 = vmatpush2.msra.mxu0 0.0
      %749 = vmatprep.subr.mxu0 0.0
      %750 = vmatpush2.msra.mxu0 0.0
      %751 = vmatprep.subr.mxu0 0.0
      %752 = vmatpush2.msra.mxu0 0.0
      %753 = vmatprep.subr.mxu0 0.0
      %754 = vmatpush2.msra.mxu0 0.0
      %755 = vmatprep.subr.mxu0 0.0
      %756 = vmatpush2.msra.mxu0 0.0
      %757 = vmatprep.subr.mxu0 0.0
      %758 = vmatpush2.msra.mxu0 0.0
      %759 = vmatprep.subr.mxu0 0.0
      %760 = vmatpush2.msra.mxu0 0.0
      %761 = vmatprep.subr.mxu0 0.0
      %762 = vmatpush2.msra.mxu0 0.0
      %763 = vmatprep.mubr.f32.mxu0 0.0
      %764 = vmatmul.mubr.f32.gmra.mxu0 %v697
      %v765 = vpop.f32.mrf.mxu0
      %v766 = vadd.f32 0.0, %v765
      %v767 = vpop.f32.mrf.mxu0
      %v768 = vadd.f32 0.0, %v767
      %769 = vdwg.mxu0
      %v770 = vadd.f32 %v688, %v766
      %v771 = vadd.f32 %v689, %v768
      %s772 = scalar_lea.vmem %s1, 56
      %v773 = vld [vmem:[%s772] sm:$0xff]
      %777 = vrot.lane.b32.xlu0 %v691, 112
      %v778 = vpop.permute.xlu0 %777
      %779 = vrot.lane.b32.xlu0 %v692, 112
      %v780 = vpop.permute.xlu0 %779
      %781 = vrot.lane.b32.xlu0 %v693, 112
      %v782 = vpop.permute.xlu0 %781
      %v783 = vsel %vm186, %v778, %v780
      %v784 = vsel %vm186, %v780, %v782
      %v788 = vsel %vm191, %v773, 0
      %790 = vmatprep.subr.mxu0 0.0
      %791 = vmatpush1.msra.mxu0 0.0
      %792 = vmatprep.subr.mxu0 0.0
      %793 = vmatpush1.msra.mxu0 0.0
      %794 = vmatprep.subr.mxu0 0.0
      %795 = vmatpush1.msra.mxu0 0.0
      %796 = vmatprep.subr.mxu0 0.0
      %797 = vmatpush1.msra.mxu0 0.0
      %798 = vmatprep.subr.mxu0 0.0
      %799 = vmatpush1.msra.mxu0 0.0
      %800 = vmatprep.subr.mxu0 0.0
      %801 = vmatpush1.msra.mxu0 0.0
      %802 = vmatprep.subr.mxu0 0.0
      %803 = vmatpush1.msra.mxu0 0.0
      %804 = vmatprep.subr.mxu0 0.0
      %805 = vmatpush1.msra.mxu0 0.0
      %806 = vmatprep.subr.mxu0 0.0
      %807 = vmatpush1.msra.mxu0 0.0
      %808 = vmatprep.subr.mxu0 0.0
      %809 = vmatpush1.msra.mxu0 0.0
      %810 = vmatprep.subr.mxu0 0.0
      %811 = vmatpush1.msra.mxu0 0.0
      %812 = vmatprep.subr.mxu0 0.0
      %813 = vmatpush1.msra.mxu0 0.0
      %814 = vmatprep.subr.mxu0 0.0
      %815 = vmatpush1.msra.mxu0 0.0
      %816 = vmatprep.subr.mxu0 0.0
      %817 = vmatpush1.msra.mxu0 0.0
      %818 = vmatprep.subr.mxu0 0.0
      %819 = vmatpush1.msra.mxu0 0.0
      %820 = vmatprep.subr.mxu0 %v784
      %821 = vmatpush1.msra.mxu0 %v783
      %822 = vmatprep.subr.mxu0 0.0
      %823 = vmatpush2.msra.mxu0 0.0
      %824 = vmatprep.subr.mxu0 0.0
      %825 = vmatpush2.msra.mxu0 0.0
      %826 = vmatprep.subr.mxu0 0.0
      %827 = vmatpush2.msra.mxu0 0.0
      %828 = vmatprep.subr.mxu0 0.0
      %829 = vmatpush2.msra.mxu0 0.0
      %830 = vmatprep.subr.mxu0 0.0
      %831 = vmatpush2.msra.mxu0 0.0
      %832 = vmatprep.subr.mxu0 0.0
      %833 = vmatpush2.msra.mxu0 0.0
      %834 = vmatprep.subr.mxu0 0.0
      %835 = vmatpush2.msra.mxu0 0.0
      %836 = vmatprep.subr.mxu0 0.0
      %837 = vmatpush2.msra.mxu0 0.0
      %838 = vmatprep.subr.mxu0 0.0
      %839 = vmatpush2.msra.mxu0 0.0
      %840 = vmatprep.subr.mxu0 0.0
      %841 = vmatpush2.msra.mxu0 0.0
      %842 = vmatprep.subr.mxu0 0.0
      %843 = vmatpush2.msra.mxu0 0.0
      %844 = vmatprep.subr.mxu0 0.0
      %845 = vmatpush2.msra.mxu0 0.0
      %846 = vmatprep.subr.mxu0 0.0
      %847 = vmatpush2.msra.mxu0 0.0
      %848 = vmatprep.subr.mxu0 0.0
      %849 = vmatpush2.msra.mxu0 0.0
      %850 = vmatprep.subr.mxu0 0.0
      %851 = vmatpush2.msra.mxu0 0.0
      %852 = vmatprep.subr.mxu0 0.0
      %853 = vmatpush2.msra.mxu0 0.0
      %854 = vmatprep.mubr.f32.mxu0 0.0
      %855 = vmatmul.mubr.f32.gmra.mxu0 %v788
      %v856 = vpop.f32.mrf.mxu0
      %v857 = vadd.f32 0.0, %v856
      %v858 = vpop.f32.mrf.mxu0
      %v859 = vadd.f32 0.0, %v858
      %860 = vdwg.mxu0
      %v861 = vadd.f32 %v770, %v857
      %v862 = vadd.f32 %v771, %v859
      %s863 = scalar_lea.vmem %s1, 64
      %v864 = vld [vmem:[%s863] sm:$0xff]
      %865 = vrot.lane.b32.xlu0 %v691, 96
      %v866 = vpop.permute.xlu0 %865
      %867 = vrot.lane.b32.xlu0 %v692, 96
      %v868 = vpop.permute.xlu0 %867
      %869 = vrot.lane.b32.xlu0 %v693, 96
      %v870 = vpop.permute.xlu0 %869
      %v871 = vsel %vm348, %v866, %v868
      %v872 = vsel %vm348, %v868, %v870
      %v876 = vsel %vm191, %v864, 0
      %878 = vmatprep.subr.mxu0 0.0
      %879 = vmatpush1.msra.mxu0 0.0
      %880 = vmatprep.subr.mxu0 0.0
      %881 = vmatpush1.msra.mxu0 0.0
      %882 = vmatprep.subr.mxu0 0.0
      %883 = vmatpush1.msra.mxu0 0.0
      %884 = vmatprep.subr.mxu0 0.0
      %885 = vmatpush1.msra.mxu0 0.0
      %886 = vmatprep.subr.mxu0 0.0
      %887 = vmatpush1.msra.mxu0 0.0
      %888 = vmatprep.subr.mxu0 0.0
      %889 = vmatpush1.msra.mxu0 0.0
      %890 = vmatprep.subr.mxu0 0.0
      %891 = vmatpush1.msra.mxu0 0.0
      %892 = vmatprep.subr.mxu0 0.0
      %893 = vmatpush1.msra.mxu0 0.0
      %894 = vmatprep.subr.mxu0 0.0
      %895 = vmatpush1.msra.mxu0 0.0
      %896 = vmatprep.subr.mxu0 0.0
      %897 = vmatpush1.msra.mxu0 0.0
      %898 = vmatprep.subr.mxu0 0.0
      %899 = vmatpush1.msra.mxu0 0.0
      %900 = vmatprep.subr.mxu0 0.0
      %901 = vmatpush1.msra.mxu0 0.0
      %902 = vmatprep.subr.mxu0 0.0
      %903 = vmatpush1.msra.mxu0 0.0
      %904 = vmatprep.subr.mxu0 0.0
      %905 = vmatpush1.msra.mxu0 0.0
      %906 = vmatprep.subr.mxu0 0.0
      %907 = vmatpush1.msra.mxu0 0.0
      %908 = vmatprep.subr.mxu0 %v872
      %909 = vmatpush1.msra.mxu0 %v871
      %910 = vmatprep.subr.mxu0 0.0
      %911 = vmatpush2.msra.mxu0 0.0
      %912 = vmatprep.subr.mxu0 0.0
      %913 = vmatpush2.msra.mxu0 0.0
      %914 = vmatprep.subr.mxu0 0.0
      %915 = vmatpush2.msra.mxu0 0.0
      %916 = vmatprep.subr.mxu0 0.0
      %917 = vmatpush2.msra.mxu0 0.0
      %918 = vmatprep.subr.mxu0 0.0
      %919 = vmatpush2.msra.mxu0 0.0
      %920 = vmatprep.subr.mxu0 0.0
      %921 = vmatpush2.msra.mxu0 0.0
      %922 = vmatprep.subr.mxu0 0.0
      %923 = vmatpush2.msra.mxu0 0.0
      %924 = vmatprep.subr.mxu0 0.0
      %925 = vmatpush2.msra.mxu0 0.0
      %926 = vmatprep.subr.mxu0 0.0
      %927 = vmatpush2.msra.mxu0 0.0
      %928 = vmatprep.subr.mxu0 0.0
      %929 = vmatpush2.msra.mxu0 0.0
      %930 = vmatprep.subr.mxu0 0.0
      %931 = vmatpush2.msra.mxu0 0.0
      %932 = vmatprep.subr.mxu0 0.0
      %933 = vmatpush2.msra.mxu0 0.0
      %934 = vmatprep.subr.mxu0 0.0
      %935 = vmatpush2.msra.mxu0 0.0
      %936 = vmatprep.subr.mxu0 0.0
      %937 = vmatpush2.msra.mxu0 0.0
      %938 = vmatprep.subr.mxu0 0.0
      %939 = vmatpush2.msra.mxu0 0.0
      %940 = vmatprep.subr.mxu0 0.0
      %941 = vmatpush2.msra.mxu0 0.0
      %942 = vmatprep.mubr.f32.mxu0 0.0
      %943 = vmatmul.mubr.f32.gmra.mxu0 %v876
      %v944 = vpop.f32.mrf.mxu0
      %v945 = vadd.f32 0.0, %v944
      %v946 = vpop.f32.mrf.mxu0
      %v947 = vadd.f32 0.0, %v946
      %948 = vdwg.mxu0
      %v949 = vadd.f32 %v861, %v945
      %v950 = vadd.f32 %v862, %v947
      %v951 = vld [vmem:[%s2] sm:$0xff]
      %953 = vset.pattern.permute.xlu0 0
      %954 = vperm.xlu0 %953, %v951
      %v955 = vpop.permute.xlu0 %954
      %v957 = vadd.f32 %v949, %v955
      %v958 = vadd.f32 %v950, %v955
      %v959 = vmin.f32 %v957, 20.0
      %v960 = vmin.f32 %v958, 20.0
      %v961 = vmul.f32 %v959, 1.442695
      %v962 = vpow.pop %v961
      %v963 = vmul.f32 %v960, 1.442695
      %v964 = vpow.pop %v963
      %v965 = vadd.f32 %v962, 1.0
      %v966 = vadd.f32 %v964, 1.0
      %v967 = vmul.f32 %v965, %v965
      %v968 = vmul.f32 %v966, %v966
      %v969 = vsub.f32 %v967, 1.0
      %v970 = vsub.f32 %v968, 1.0
      %v971 = vmul.f32 %v957, %v969
      %v972 = vmul.f32 %v958, %v970
      %v973 = vadd.f32 %v967, 1.0
      %v974 = vadd.f32 %v968, 1.0
      %v975 = vrcp.pop %v973
      %v976 = vrcp.pop %v974
      %v977 = vmul.f32 %v971, %v975
      %v978 = vmul.f32 %v972, %v976
      %vm979 = vcmp.gt.f32.partialorder %v957, 20.0
      %vm980 = vcmp.gt.f32.partialorder %v958, 20.0
      %v981 = vsel %vm979, %v957, %v977
      %v982 = vsel %vm980, %v958, %v978
      %983 = vst [vmem:[%s170] sm:$0xff] %v981
      %984 = vst [vmem:[%s170 + $0x8] sm:$0xff] %v982
      %p985 = scmp.lt.s32.totalorder %s14, 1
      %s986 = scalar_select %p985, %s14, 1
      %s987 = smul.addr %s986, 2
      %s988 = smul.addr %s987, 8
      %s989 = scalar_lea.vmem %s3, %s988
      // Predicated region
      $region33: #{conv_layer3_forward.1} parent=31 // pred_check
        %p990 = pneg %p100
      $region34: #{conv_layer3_forward.1} parent=31 // pred_check_branch
        %992 = sbr.rel (%p990) target = $region36
      $region35: #{conv_layer3_forward.1} parent=31 // pred_region
        _
      $region36: #{conv_layer3_forward.1} parent=31 // pred_fallthru
        _
    $region32: #{conv_layer3_forward.1} parent=5 // pred_fallthru
      _
    %p993 = scmp.le.s32.totalorder 2, %s9
    // Predicated region
    $region37: #{conv_layer3_forward.1} parent=5 // pred_check
      %p994 = pneg %p993
    $region38: #{conv_layer3_forward.1} parent=5 // pred_check_branch
      %996 = sbr.rel (%p994) target = $region40
    $region39: #{conv_layer3_forward.1} parent=5 // pred_region
      %s997 = ssub.s32 %s9, 2
      // Predicated region
      $region41: #{conv_layer3_forward.1} parent=39 // pred_check
        %p998 = pneg %p106
      $region42: #{conv_layer3_forward.1} parent=39 // pred_check_branch
        %1000 = sbr.rel (%p998) target = $region44
      $region43: #{conv_layer3_forward.1} parent=39 // pred_region
        %p1001 = scmp.lt.s32.totalorder %s15, 1
        %s1002 = scalar_select %p1001, %s15, 1
        %s1003 = smul.addr %s1002, 2
        %s1004 = smul.addr %s1003, 8
        %s1005 = scalar_lea.vmem %s3, %s1004
      $region44: #{conv_layer3_forward.1} parent=39 // pred_fallthru
        _
    $region40: #{conv_layer3_forward.1} parent=5 // pred_fallthru
      _
  $region6: #{conv_layer3_forward.1} parent=0 // loop_footer
    %s13 = sadd.s32 1, %s9
  $region7: #{conv_layer3_forward.1} parent=0 // loop_footer_branch
    %8 = sbr.rel target = $region3
  $region8: #{conv_layer3_forward.1} parent=0 // loop_exit
    _

</llo_original>
